<compile_context>
chip_gen: v6e
topology: v6e:2x2x1
jax: 0.10.0
libtpu: 0.0.40
codegen_flags: <defaults>
</compile_context>

<pallas_src>
import jax
import jax.numpy as jnp
from jax.experimental import pallas as pl
from jax.experimental.pallas import tpu as pltpu


SCALE = 2
IN_DIM = SCALE * SCALE * 9                  # 36
HID_DIM = int(9 * SCALE * SCALE * 2.5)      # 90
HID_PAD = 128                               # hidden dim padded to full lane width


def _round_up(a, b):
    return (a + b - 1) // b * b


def _sigmoid_1eup(x):
    # sigmoid(x) = 0.5 * tanh(0.5 * x) + 0.5  -> a single EUP push per vreg;
    # the mul/add land in otherwise idle VALU slots.
    return 0.5 * jnp.tanh(0.5 * x) + 0.5


def _ae_kernel(x_ref, we_ref, be_ref, wd_ref, bd_ref, o_ref):
    # x_ref:  (TM, IN_DIM)       input rows (producer dtype; cast in-kernel)
    # we_ref: (IN_DIM, HID_PAD)  encoder weight, transposed + zero-padded cols
    # be_ref: (1, HID_PAD)       encoder bias, zero-padded (f32)
    # wd_ref: (HID_PAD, IN_DIM)  decoder weight, transposed + zero-padded rows
    # bd_ref: (1, IN_DIM)        decoder bias (f32)
    # o_ref:  (TM, IN_DIM)
    x = x_ref[...].astype(we_ref.dtype)          # cast here, not in the wrapper
    h = jnp.dot(x, we_ref[...], preferred_element_type=jnp.float32) + be_ref[...]
    h = _sigmoid_1eup(h)                         # padded cols -> 0.5; harmless
    y = jnp.dot(h.astype(wd_ref.dtype), wd_ref[...],
                preferred_element_type=jnp.float32) + bd_ref[...]
    o_ref[...] = _sigmoid_1eup(y).astype(o_ref.dtype)


def prepare_params(w_enc, b_enc, w_dec, b_dec, compute_dtype=jnp.float32):
    """One-time parameter prep: transpose torch (out, in) weights and zero-pad
    the hidden dimension 90 -> 128.  Do this once, not per forward call."""
    we_p = jnp.zeros((IN_DIM, HID_PAD), jnp.float32).at[:, :HID_DIM].set(
        w_enc.T.astype(jnp.float32))
    be_p = jnp.zeros((1, HID_PAD), jnp.float32).at[:, :HID_DIM].set(
        b_enc.astype(jnp.float32))
    wd_p = jnp.zeros((HID_PAD, IN_DIM), jnp.float32).at[:HID_DIM, :].set(
        w_dec.T.astype(jnp.float32))
    bd_p = b_dec.reshape(1, IN_DIM).astype(jnp.float32)
    return (we_p.astype(compute_dtype), be_p, wd_p.astype(compute_dtype), bd_p)


def ae_forward(x, params, path="all", *, block_rows=8192, out_dtype=jnp.float32):
    """JAX/Pallas equivalent of AE.forward (path='all').

    x          : (B, C, 6, 6)
    params     : output of prepare_params(...) (f32 or bf16 weights)
    block_rows : max rows per grid step (rounded to a multiple of 8, clamped
                 to fit VMEM and to give >= 2 grid steps for megacore)
    out_dtype  : jnp.float32 (default) or jnp.bfloat16 to halve write bytes
                 (useful on v5e where the kernel is closest to HBM-bound).
    """
    if path != "all":
        # TODO(synk): 'encoding' / 'decoding' partial paths not wired through
        # the fused kernel; only the 'all' path is implemented here.
        raise NotImplementedError("only path='all' is implemented")

    we_p, be_p, wd_p, bd_p = params

    B, C = x.shape[0], x.shape[1]
    M = B * C
    # No astype / pad here: cast happens in-kernel, ragged tail handled by the
    # (non-divisible) grid -- avoids extra HBM read+write passes.
    x2d = x.reshape(M, IN_DIM)

    in_isz = jnp.dtype(x2d.dtype).itemsize
    w_isz = jnp.dtype(we_p.dtype).itemsize
    out_isz = jnp.dtype(out_dtype).itemsize

    # Row tile: multiple of 8; at least 2 grid steps when M > 8 so both v7x
    # TensorCores get work over the "parallel" axis.
    if M <= 8:
        tm = M                                   # block == full dim is legal
    else:
        tm = min(block_rows, _round_up(pl.cdiv(M, 2), 8))
        tm = max(8, _round_up(tm, 8))

    def _vmem_bytes(t):
        lane_pad = 128                           # 36-wide tiles lane-pad to 128
        return (2 * t * lane_pad * in_isz        # double-buffered x tile
                + 2 * t * lane_pad * out_isz     # double-buffered out tile
                + 2 * t * HID_PAD * 4            # h / y f32 intermediates
                + 2 * IN_DIM * HID_PAD * w_isz   # resident weights
                + (HID_PAD + IN_DIM) * 4         # biases
                + (1 << 20))                     # slack

    VMEM_BUDGET = 40 << 20                       # safe for v7x 64 MiB physical
    while tm > 8 and _vmem_bytes(tm) > VMEM_BUDGET:
        tm = max(8, _round_up(tm // 2, 8))

    grid = (pl.cdiv(M, tm),)
    # Raise the scoped-VMEM limit above v5e's 16 MiB default; cap well under
    # v7x's 64 MiB physical VMEM.
    vmem_limit = int(min(48 << 20, max(32 << 20, _vmem_bytes(tm))))

    cost = pl.CostEstimate(
        flops=4 * M * IN_DIM * HID_PAD,                     # two matmuls
        transcendentals=M * (HID_PAD + IN_DIM),             # one tanh / element
        bytes_accessed=(M * IN_DIM * (in_isz + out_isz)     # read x, write out
                        + 2 * IN_DIM * HID_PAD * w_isz      # weights
                        + (HID_PAD + IN_DIM) * 4),          # biases
    )

    out2d = pl.pallas_call(
        _ae_kernel,
        out_shape=jax.ShapeDtypeStruct((M, IN_DIM), out_dtype),
        grid=grid,
        in_specs=[
            pl.BlockSpec((tm, IN_DIM), lambda i: (i, 0)),        # x tile
            pl.BlockSpec((IN_DIM, HID_PAD), lambda i: (0, 0)),   # enc weight (resident)
            pl.BlockSpec((1, HID_PAD), lambda i: (0, 0)),        # enc bias
            pl.BlockSpec((HID_PAD, IN_DIM), lambda i: (0, 0)),   # dec weight
            pl.BlockSpec((1, IN_DIM), lambda i: (0, 0)),         # dec bias
        ],
        out_specs=pl.BlockSpec((tm, IN_DIM), lambda i: (i, 0)),
        compiler_params=pltpu.CompilerParams(
            dimension_semantics=("parallel",),
            vmem_limit_bytes=vmem_limit,
        ),
        cost_estimate=cost,
    )(x2d, we_p, be_p, wd_p, bd_p)

    return out2d.reshape(B, C, SCALE * 3, SCALE * 3)


def _init_params(key):
    """Deterministic init matching torch Linear shapes / default init
    (Uniform(-1/sqrt(fan_in), 1/sqrt(fan_in)))."""
    k1, k2, k3, k4 = jax.random.split(key, 4)
    bound_e = 1.0 / jnp.sqrt(float(IN_DIM))
    bound_d = 1.0 / jnp.sqrt(float(HID_DIM))
    w_enc = jax.random.uniform(k1, (HID_DIM, IN_DIM), jnp.float32, -bound_e, bound_e)
    b_enc = jax.random.uniform(k2, (HID_DIM,), jnp.float32, -bound_e, bound_e)
    w_dec = jax.random.uniform(k3, (IN_DIM, HID_DIM), jnp.float32, -bound_d, bound_d)
    b_dec = jax.random.uniform(k4, (IN_DIM,), jnp.float32, -bound_d, bound_d)
    return w_enc, b_enc, w_dec, b_dec


def _reference_forward(x, w_enc, b_enc, w_dec, b_dec):
    B, C = x.shape[0], x.shape[1]
    h = x.reshape(B, C, IN_DIM) @ w_enc.T + b_enc
    h = jax.nn.sigmoid(h)
    y = h @ w_dec.T + b_dec
    y = jax.nn.sigmoid(y)
    return y.reshape(B, C, SCALE * 3, SCALE * 3)


if __name__ == "__main__":
    key = jax.random.PRNGKey(0)
    kx, kp, kx2 = jax.random.split(key, 3)

    w_enc, b_enc, w_dec, b_dec = _init_params(kp)
    params_f32 = prepare_params(w_enc, b_enc, w_dec, b_dec)      # hoisted, once

    # Shape matching the module (scale=2 -> 6x6 spatial): B=2, C=4.
    B, C = 2, 4
    x = jax.random.normal(kx, (B, C, SCALE * 3, SCALE * 3), jnp.float32)
    out = jax.block_until_ready(ae_forward(x, params_f32, path="all"))
    ref = _reference_forward(x, w_enc, b_enc, w_dec, b_dec)
    assert out.shape == (B, C, 6, 6), out.shape
    assert jnp.allclose(out, ref, atol=1e-4, rtol=1e-4), "mismatch vs reference"

    # Multi-tile grid with a ragged (non-divisible, un-padded) tail:
    # M = 150 rows, 64-row tiles -> grid of 3, last block partial.
    B2, C2 = 3, 50
    x2 = jax.random.normal(kx2, (B2, C2, SCALE * 3, SCALE * 3), jnp.float32)
    out2 = jax.block_until_ready(ae_forward(x2, params_f32, block_rows=64))
    ref2 = _reference_forward(x2, w_enc, b_enc, w_dec, b_dec)
    assert out2.shape == (B2, C2, 6, 6), out2.shape
    assert jnp.allclose(out2, ref2, atol=1e-4, rtol=1e-4), "mismatch (tiled path)"

    # bf16 compute path (cast happens in-kernel; looser tolerance expected).
    params_bf16 = prepare_params(w_enc, b_enc, w_dec, b_dec,
                                 compute_dtype=jnp.bfloat16)
    out3 = jax.block_until_ready(ae_forward(x2, params_bf16, block_rows=64))
    assert jnp.allclose(out3, ref2, atol=3e-2, rtol=3e-2), "mismatch (bf16 path)"

    print("KERNEL_OK")
</pallas_src>

<mosaic_0001>
module attributes {stable_mosaic.version = 11 : i64} {
  func.func @_ae_kernel(%arg0: i32, %arg1: memref<8x36xf32, #tpu.memory_space<vmem>>, %arg2: memref<36x128xf32, #tpu.memory_space<vmem>>, %arg3: memref<1x128xf32, #tpu.memory_space<vmem>>, %arg4: memref<128x36xf32, #tpu.memory_space<vmem>>, %arg5: memref<1x36xf32, #tpu.memory_space<vmem>>, %arg6: memref<8x36xf32, #tpu.memory_space<vmem>>) attributes {dimension_semantics = [#tpu.dimension_semantics<parallel>], iteration_bounds = array<i64: 1>, scalar_prefetch = 0 : i64, scratch_operands = 0 : i64, tpu.core_type = #tpu.core_type<tc>, window_params = [{transform_indices = @transform_0, window_bounds = array<i64: 8, 36>}, {pipeline_mode = #tpu.pipeline_mode<synchronous>, transform_indices = @transform_1, window_bounds = array<i64: 36, 128>}, {pipeline_mode = #tpu.pipeline_mode<synchronous>, transform_indices = @transform_2, window_bounds = array<i64: 1, 128>}, {pipeline_mode = #tpu.pipeline_mode<synchronous>, transform_indices = @transform_3, window_bounds = array<i64: 128, 36>}, {pipeline_mode = #tpu.pipeline_mode<synchronous>, transform_indices = @transform_4, window_bounds = array<i64: 1, 36>}, {transform_indices = @transform_5, window_bounds = array<i64: 8, 36>}]} {
    %c0 = arith.constant 0 : index
    %c0_0 = arith.constant 0 : index
    %0 = vector.load %arg1[%c0, %c0_0] : memref<8x36xf32, #tpu.memory_space<vmem>>, vector<8x36xf32>
    %c0_1 = arith.constant 0 : index
    %c0_2 = arith.constant 0 : index
    %1 = vector.load %arg2[%c0_1, %c0_2] : memref<36x128xf32, #tpu.memory_space<vmem>>, vector<36x128xf32>
    %cst = arith.constant dense<0.000000e+00> : vector<8x128xf32>
    %2 = tpu.matmul %0, %1, %cst {dimension_numbers = #tpu.dot_dimension_numbers<[1], [0], [0], [1], [0, 0, 1, 1], [], []>} : vector<8x36xf32>, vector<36x128xf32>, vector<8x128xf32> -> vector<8x128xf32>
    %c0_3 = arith.constant 0 : index
    %c0_4 = arith.constant 0 : index
    %3 = vector.load %arg3[%c0_3, %c0_4] : memref<1x128xf32, #tpu.memory_space<vmem>>, vector<1x128xf32>
    %4 = vector.broadcast %3 : vector<1x128xf32> to vector<8x128xf32>
    %5 = arith.addf %2, %4 : vector<8x128xf32>
    %cst_5 = arith.constant 5.000000e-01 : f32
    %6 = vector.broadcast %cst_5 : f32 to vector<8x128xf32>
    %7 = arith.mulf %6, %5 : vector<8x128xf32>
    %8 = math.tanh %7 : vector<8x128xf32>
    %cst_6 = arith.constant 5.000000e-01 : f32
    %9 = vector.broadcast %cst_6 : f32 to vector<8x128xf32>
    %10 = arith.mulf %9, %8 : vector<8x128xf32>
    %cst_7 = arith.constant 5.000000e-01 : f32
    %11 = vector.broadcast %cst_7 : f32 to vector<8x128xf32>
    %12 = arith.addf %10, %11 : vector<8x128xf32>
    %c0_8 = arith.constant 0 : index
    %c0_9 = arith.constant 0 : index
    %13 = vector.load %arg4[%c0_8, %c0_9] : memref<128x36xf32, #tpu.memory_space<vmem>>, vector<128x36xf32>
    %cst_10 = arith.constant dense<0.000000e+00> : vector<8x36xf32>
    %14 = tpu.matmul %12, %13, %cst_10 {dimension_numbers = #tpu.dot_dimension_numbers<[1], [0], [0], [1], [0, 0, 1, 1], [], []>} : vector<8x128xf32>, vector<128x36xf32>, vector<8x36xf32> -> vector<8x36xf32>
    %c0_11 = arith.constant 0 : index
    %c0_12 = arith.constant 0 : index
    %15 = vector.load %arg5[%c0_11, %c0_12] : memref<1x36xf32, #tpu.memory_space<vmem>>, vector<1x36xf32>
    %16 = vector.broadcast %15 : vector<1x36xf32> to vector<8x36xf32>
    %17 = arith.addf %14, %16 : vector<8x36xf32>
    %cst_13 = arith.constant 5.000000e-01 : f32
    %18 = vector.broadcast %cst_13 : f32 to vector<8x36xf32>
    %19 = arith.mulf %18, %17 : vector<8x36xf32>
    %20 = math.tanh %19 : vector<8x36xf32>
    %cst_14 = arith.constant 5.000000e-01 : f32
    %21 = vector.broadcast %cst_14 : f32 to vector<8x36xf32>
    %22 = arith.mulf %21, %20 : vector<8x36xf32>
    %cst_15 = arith.constant 5.000000e-01 : f32
    %23 = vector.broadcast %cst_15 : f32 to vector<8x36xf32>
    %24 = arith.addf %22, %23 : vector<8x36xf32>
    %c0_16 = arith.constant 0 : index
    %c0_17 = arith.constant 0 : index
    %25 = vector.load %arg6[%c0_16, %c0_17] : memref<8x36xf32, #tpu.memory_space<vmem>>, vector<8x36xf32>
    tpu.vector_store %arg6[%c0_16, %c0_17], %24 {strides = array<i32>} : memref<8x36xf32, #tpu.memory_space<vmem>>, vector<8x36xf32>,
    return
  }
  func.func @transform_0(%arg0: i32) -> (i32, i32) {
    %c0_i32 = arith.constant 0 : i32
    %c0_i32_0 = arith.constant 0 : i32
    return %arg0, %c0_i32 : i32, i32
  }
  func.func @transform_1(%arg0: i32) -> (i32, i32) {
    %c0_i32 = arith.constant 0 : i32
    %c0_i32_0 = arith.constant 0 : i32
    %c0_i32_1 = arith.constant 0 : i32
    return %c0_i32, %c0_i32_0 : i32, i32
  }
  func.func @transform_2(%arg0: i32) -> (i32, i32) {
    %c0_i32 = arith.constant 0 : i32
    %c0_i32_0 = arith.constant 0 : i32
    %c0_i32_1 = arith.constant 0 : i32
    return %c0_i32, %c0_i32_0 : i32, i32
  }
  func.func @transform_3(%arg0: i32) -> (i32, i32) {
    %c0_i32 = arith.constant 0 : i32
    %c0_i32_0 = arith.constant 0 : i32
    %c0_i32_1 = arith.constant 0 : i32
    return %c0_i32, %c0_i32_0 : i32, i32
  }
  func.func @transform_4(%arg0: i32) -> (i32, i32) {
    %c0_i32 = arith.constant 0 : i32
    %c0_i32_0 = arith.constant 0 : i32
    %c0_i32_1 = arith.constant 0 : i32
    return %c0_i32, %c0_i32_0 : i32, i32
  }
  func.func @transform_5(%arg0: i32) -> (i32, i32) {
    %c0_i32 = arith.constant 0 : i32
    %c0_i32_0 = arith.constant 0 : i32
    return %arg0, %c0_i32 : i32, i32
  }
}

</mosaic_0001>

<llo_original>
// kernel: tpu_custom_call.1
$region0: #{tpu_custom_call.1}
  #allocation0 [shape = 'u32[]', space=smem, size = 0x4, offset = 0x4, fixed_abs, tag = 'smem constant byte address 0x4 - core index']
  #allocation1 [shape = 'u32[144,128]{1,0:T(1,128)}', space=vmem, size = 0x12000, scoped, tag = 'internal scratch']
  %s0 = inlined_call_operand.vmem [shape: f32[8,36], index: 0, kind: input, shape index: {}]
  %s1 = inlined_call_operand.vmem [shape: f32[36,128], index: 1, kind: input, shape index: {}]
  %s2 = inlined_call_operand.vmem [shape: f32[1,128], index: 2, kind: input, shape index: {}]
  %s3 = inlined_call_operand.vmem [shape: f32[128,36], index: 3, kind: input, shape index: {}]
  %s4 = inlined_call_operand.vmem [shape: f32[1,36], index: 4, kind: input, shape index: {}]
  %s5 = inlined_call_operand.hbm [shape: f32[8,36], index: 5, kind: output, shape index: {}]
  %s6 = sld [smem:[#allocation0]]
  $region30: #{tpu_custom_call.1} parent=0
    _
  %s8 = ssub.s32 1, %s6
  %s9 = scalar_select 0, %s8, %s6
  $region1: #{tpu_custom_call.1} parent=0
    #allocation2 [shape = 'u8[4096]{0}', space=vmem, size = 0x1000, scoped, tag = 'output window, operand 0, single buffered']
    #allocation3 [shape = 's32[1]{0}', space=sflag, size = 0x4, scoped, tag = 'scoped memory for tpu_custom_call.1']
    %10 = vsyncpa [#allocation3], 0
    // Predicated region
    $region2: #{tpu_custom_call.1} parent=1 // pred_check
      _
    $region3: #{tpu_custom_call.1} parent=1 // pred_check_branch
      %12 = sbr.rel (0) target = $region5
    $region4: #{tpu_custom_call.1} parent=1 // pred_region
      _
    $region5: #{tpu_custom_call.1} parent=1 // pred_fallthru
      _
    // Predicated region
    $region6: #{tpu_custom_call.1} parent=1 // pred_check
      _
    $region7: #{tpu_custom_call.1} parent=1 // pred_check_branch
      %14 = sbr.rel (0) target = $region9
    $region8: #{tpu_custom_call.1} parent=1 // pred_region
      _
    $region9: #{tpu_custom_call.1} parent=1 // pred_fallthru
      _
    // Predicated region
    $region10: #{tpu_custom_call.1} parent=1 // pred_check
      _
    $region11: #{tpu_custom_call.1} parent=1 // pred_check_branch
      %16 = sbr.rel (0) target = $region13
    $region12: #{tpu_custom_call.1} parent=1 // pred_region
      _
    $region13: #{tpu_custom_call.1} parent=1 // pred_fallthru
      _
    // Predicated region
    $region14: #{tpu_custom_call.1} parent=1 // pred_check
      _
    $region15: #{tpu_custom_call.1} parent=1 // pred_check_branch
      %18 = sbr.rel (0) target = $region17
    $region16: #{tpu_custom_call.1} parent=1 // pred_region
      _
    $region17: #{tpu_custom_call.1} parent=1 // pred_fallthru
      _
    // Predicated region
    $region18: #{tpu_custom_call.1} parent=1 // pred_check
      _
    $region19: #{tpu_custom_call.1} parent=1 // pred_check_branch
      %20 = sbr.rel (0) target = $region21
    $region20: #{tpu_custom_call.1} parent=1 // pred_region
      _
    $region21: #{tpu_custom_call.1} parent=1 // pred_fallthru
      _
    %v21 = vld [vmem:[%s0] sm:$0xff]
    %v22 = vld [vmem:[%s1] sm:$0xff]
    %v23 = vld [vmem:[%s1 + $0x8] sm:$0xff]
    %v24 = vld [vmem:[%s1 + $0x10] sm:$0xff]
    %v25 = vld [vmem:[%s1 + $0x18] sm:$0xff]
    %v26 = vld [vmem:[%s1 + $0x20] sm:$0xf]
    %v27 = vld [vmem:[%s2] sm:$0x1]
    %v29 = vlaneseq
    %v30 = vshrl.u32 %v29, 7
    %v31 = vsub.s32 0, %v30
    %v32 = vrot.slane %v27, %v31
    %vm34 = vcmask 293888
    %v36 = vsel %vm34, %v21, 0
    %vm38 = vcmask 1043456
    %v40 = vsel %vm38, %v26, 0
    %42 = vmatprep.subr.mxu0 0.0
    %43 = vmatpush1.msra.mxu0 0.0
    %44 = vmatprep.subr.mxu0 0.0
    %45 = vmatpush1.msra.mxu0 0.0
    %46 = vmatprep.subr.mxu0 0.0
    %47 = vmatpush1.msra.mxu0 0.0
    %48 = vmatprep.subr.mxu0 0.0
    %49 = vmatpush1.msra.mxu0 0.0
    %50 = vmatprep.subr.mxu0 0.0
    %51 = vmatpush1.msra.mxu0 0.0
    %52 = vmatprep.subr.mxu0 0.0
    %53 = vmatpush1.msra.mxu0 0.0
    %54 = vmatprep.subr.mxu0 0.0
    %55 = vmatpush1.msra.mxu0 0.0
    %56 = vmatprep.subr.mxu0 0.0
    %57 = vmatpush1.msra.mxu0 0.0
    %58 = vmatprep.subr.mxu0 0.0
    %59 = vmatpush1.msra.mxu0 0.0
    %60 = vmatprep.subr.mxu0 0.0
    %61 = vmatpush1.msra.mxu0 0.0
    %62 = vmatprep.subr.mxu0 0.0
    %63 = vmatpush1.msra.mxu0 0.0
    %64 = vmatprep.subr.mxu0 0.0
    %65 = vmatpush1.msra.mxu0 %v40
    %66 = vmatprep.subr.mxu0 0.0
    %67 = vmatpush1.msra.mxu0 %v25
    %68 = vmatprep.subr.mxu0 0.0
    %69 = vmatpush1.msra.mxu0 %v24
    %70 = vmatprep.subr.mxu0 0.0
    %71 = vmatpush1.msra.mxu0 %v23
    %72 = vmatprep.subr.mxu0 0.0
    %73 = vmatpush1.msra.mxu0 %v22
    %74 = vmatprep.subr.mxu0 0.0
    %75 = vmatpush2.msra.mxu0 0.0
    %76 = vmatprep.subr.mxu0 0.0
    %77 = vmatpush2.msra.mxu0 0.0
    %78 = vmatprep.subr.mxu0 0.0
    %79 = vmatpush2.msra.mxu0 0.0
    %80 = vmatprep.subr.mxu0 0.0
    %81 = vmatpush2.msra.mxu0 0.0
    %82 = vmatprep.subr.mxu0 0.0
    %83 = vmatpush2.msra.mxu0 0.0
    %84 = vmatprep.subr.mxu0 0.0
    %85 = vmatpush2.msra.mxu0 0.0
    %86 = vmatprep.subr.mxu0 0.0
    %87 = vmatpush2.msra.mxu0 0.0
    %88 = vmatprep.subr.mxu0 0.0
    %89 = vmatpush2.msra.mxu0 0.0
    %90 = vmatprep.subr.mxu0 0.0
    %91 = vmatpush2.msra.mxu0 0.0
    %92 = vmatprep.subr.mxu0 0.0
    %93 = vmatpush2.msra.mxu0 0.0
    %94 = vmatprep.subr.mxu0 0.0
    %95 = vmatpush2.msra.mxu0 0.0
    %96 = vmatprep.subr.mxu0 0.0
    %97 = vmatpush2.msra.mxu0 0.0
    %98 = vmatprep.subr.mxu0 0.0
    %99 = vmatpush2.msra.mxu0 0.0
    %100 = vmatprep.subr.mxu0 0.0
    %101 = vmatpush2.msra.mxu0 0.0
    %102 = vmatprep.subr.mxu0 0.0
    %103 = vmatpush2.msra.mxu0 0.0
    %104 = vmatprep.subr.mxu0 0.0
    %105 = vmatpush2.msra.mxu0 0.0
    %106 = vmatprep.mubr.f32.mxu0 0.0
    %107 = vmatmul.mubr.f32.gmra.mxu0 %v36
    %v108 = vpop.f32.mrf.mxu0
    %v109 = vadd.f32 %v32, %v108
    %v110 = vpop.f32.mrf.mxu0
    %111 = vdwg.mxu0
    %v112 = vmul.f32 %v109, 0.5
    %v113 = vtanh.pop %v112
    %v114 = vmul.f32 %v113, 0.5
    %v115 = vadd.f32 %v114, 0.5
    %v116 = vld [vmem:[%s3] sm:$0xff]
    %v117 = vld [vmem:[%s3 + $0x8] sm:$0xff]
    %v118 = vld [vmem:[%s3 + $0x10] sm:$0xff]
    %v119 = vld [vmem:[%s3 + $0x18] sm:$0xff]
    %v120 = vld [vmem:[%s3 + $0x20] sm:$0xff]
    %v121 = vld [vmem:[%s3 + $0x28] sm:$0xff]
    %v122 = vld [vmem:[%s3 + $0x30] sm:$0xff]
    %v123 = vld [vmem:[%s3 + $0x38] sm:$0xff]
    %v124 = vld [vmem:[%s3 + $0x40] sm:$0xff]
    %v125 = vld [vmem:[%s3 + $0x48] sm:$0xff]
    %v126 = vld [vmem:[%s3 + $0x50] sm:$0xff]
    %v127 = vld [vmem:[%s3 + $0x58] sm:$0xff]
    %v128 = vld [vmem:[%s3 + $0x60] sm:$0xff]
    %v129 = vld [vmem:[%s3 + $0x68] sm:$0xff]
    %v130 = vld [vmem:[%s3 + $0x70] sm:$0xff]
    %v131 = vld [vmem:[%s3 + $0x78] sm:$0xff]
    %v132 = vld [vmem:[%s4] sm:$0x1]
    %v134 = vlaneseq
    %v135 = vshrl.u32 %v134, 7
    %v136 = vsub.s32 0, %v135
    %v137 = vrot.slane %v132, %v136
    %139 = vmatprep.subr.mxu0 0.0
    %140 = vmatpush1.msra.mxu0 %v131
    %141 = vmatprep.subr.mxu0 0.0
    %142 = vmatpush1.msra.mxu0 %v130
    %143 = vmatprep.subr.mxu0 0.0
    %144 = vmatpush1.msra.mxu0 %v129
    %145 = vmatprep.subr.mxu0 0.0
    %146 = vmatpush1.msra.mxu0 %v128
    %147 = vmatprep.subr.mxu0 0.0
    %148 = vmatpush1.msra.mxu0 %v127
    %149 = vmatprep.subr.mxu0 0.0
    %150 = vmatpush1.msra.mxu0 %v126
    %151 = vmatprep.subr.mxu0 0.0
    %152 = vmatpush1.msra.mxu0 %v125
    %153 = vmatprep.subr.mxu0 0.0
    %154 = vmatpush1.msra.mxu0 %v124
    %155 = vmatprep.subr.mxu0 0.0
    %156 = vmatpush1.msra.mxu0 %v123
    %157 = vmatprep.subr.mxu0 0.0
    %158 = vmatpush1.msra.mxu0 %v122
    %159 = vmatprep.subr.mxu0 0.0
    %160 = vmatpush1.msra.mxu0 %v121
    %161 = vmatprep.subr.mxu0 0.0
    %162 = vmatpush1.msra.mxu0 %v120
    %163 = vmatprep.subr.mxu0 0.0
    %164 = vmatpush1.msra.mxu0 %v119
    %165 = vmatprep.subr.mxu0 0.0
    %166 = vmatpush1.msra.mxu0 %v118
    %167 = vmatprep.subr.mxu0 0.0
    %168 = vmatpush1.msra.mxu0 %v117
    %169 = vmatprep.subr.mxu0 0.0
    %170 = vmatpush1.msra.mxu0 %v116
    %171 = vmatprep.subr.mxu0 0.0
    %172 = vmatpush2.msra.mxu0 0.0
    %173 = vmatprep.subr.mxu0 0.0
    %174 = vmatpush2.msra.mxu0 0.0
    %175 = vmatprep.subr.mxu0 0.0
    %176 = vmatpush2.msra.mxu0 0.0
    %177 = vmatprep.subr.mxu0 0.0
    %178 = vmatpush2.msra.mxu0 0.0
    %179 = vmatprep.subr.mxu0 0.0
    %180 = vmatpush2.msra.mxu0 0.0
    %181 = vmatprep.subr.mxu0 0.0
    %182 = vmatpush2.msra.mxu0 0.0
    %183 = vmatprep.subr.mxu0 0.0
    %184 = vmatpush2.msra.mxu0 0.0
    %185 = vmatprep.subr.mxu0 0.0
    %186 = vmatpush2.msra.mxu0 0.0
    %187 = vmatprep.subr.mxu0 0.0
    %188 = vmatpush2.msra.mxu0 0.0
    %189 = vmatprep.subr.mxu0 0.0
    %190 = vmatpush2.msra.mxu0 0.0
    %191 = vmatprep.subr.mxu0 0.0
    %192 = vmatpush2.msra.mxu0 0.0
    %193 = vmatprep.subr.mxu0 0.0
    %194 = vmatpush2.msra.mxu0 0.0
    %195 = vmatprep.subr.mxu0 0.0
    %196 = vmatpush2.msra.mxu0 0.0
    %197 = vmatprep.subr.mxu0 0.0
    %198 = vmatpush2.msra.mxu0 0.0
    %199 = vmatprep.subr.mxu0 0.0
    %200 = vmatpush2.msra.mxu0 0.0
    %201 = vmatprep.subr.mxu0 0.0
    %202 = vmatpush2.msra.mxu0 0.0
    %203 = vmatprep.mubr.f32.mxu0 0.0
    %204 = vmatmul.mubr.f32.gmra.mxu0 %v115
    %v205 = vpop.f32.mrf.mxu0
    %v206 = vadd.f32 %v137, %v205
    %v207 = vpop.f32.mrf.mxu0
    %208 = vdwg.mxu0
    %v209 = vmul.f32 %v206, 0.5
    %v210 = vtanh.pop %v209
    %v211 = vmul.f32 %v210, 0.5
    %v212 = vadd.f32 %v211, 0.5
    %213 = vst.msk [vmem:[#allocation2] sm:$0xff] %vm34, %v212
    // Predicated region
    $region22: #{tpu_custom_call.1} parent=1 // pred_check
      _
    $region23: #{tpu_custom_call.1} parent=1 // pred_check_branch
      %215 = sbr.rel (0) target = $region25
    $region24: #{tpu_custom_call.1} parent=1 // pred_region
      %s217 = ssub.s32 128, 128
      %218 = vsyncadd [#allocation3], %s217
      %s220 = sshll.u32 [#allocation2], 4
      %s221 = int_to_ptr.vmem [resolvable:$true] %s220
      %223 = dma.vmem_to_hbm [thread:$0]  %s221, 128, %s5, [#allocation3]
    $region25: #{tpu_custom_call.1} parent=1 // pred_fallthru
      _
    // Predicated region
    $region26: #{tpu_custom_call.1} parent=1 // pred_check
      _
    $region27: #{tpu_custom_call.1} parent=1 // pred_check_branch
      %225 = sbr.rel (0) target = $region29
    $region28: #{tpu_custom_call.1} parent=1 // pred_region
      %226 = dma.done [#allocation3], 128
    $region29: #{tpu_custom_call.1} parent=1 // pred_fallthru
      _
    %227 = vsyncpa [#allocation3], 1

</llo_original>
